<compile_context>
chip_gen: v7x
topology: tpu7x:2x2x1
jax: 0.10.0
libtpu: 0.0.40
codegen_flags: <defaults>
</compile_context>

<pallas_src>
import jax
import jax.numpy as jnp
from jax.experimental import pallas as pl

# ---- Config: FeedForward(dim=32, hidden_dim=None, multiple_of=32, dropout=0.0) ----
B, S, D = 2, 8, 32
MULTIPLE_OF = 32
_h = int(2 * (4 * D) / 3)
HIDDEN = MULTIPLE_OF * ((_h + MULTIPLE_OF - 1) // MULTIPLE_OF)   # = 96


def feed_forward_kernel(x_ref, w1_ref, w3_ref, w2_ref, o_ref):
    """x_ref: (N, D); w1/w3_ref: (D, HIDDEN); w2_ref: (HIDDEN, D); o_ref: (N, D)."""
    x = x_ref[...].astype(jnp.float32)                                  # (N, D)
    a = jnp.dot(x, w1_ref[...], preferred_element_type=jnp.float32)    # (N, H)
    g = jnp.dot(x, w3_ref[...], preferred_element_type=jnp.float32)    # (N, H)
    h = (a * jax.nn.sigmoid(a)) * g                                     # SwiGLU gate (f32, sigmoid -> EUP)
    y = jnp.dot(h, w2_ref[...], preferred_element_type=jnp.float32)    # (N, D)
    # nn.Dropout is identity at inference (eval / p effectively 0); nothing to do.
    # TODO(synk): training-mode dropout would need pltpu.prng_seed / prng_random_bits.
    o_ref[...] = y.astype(o_ref.dtype)


def feed_forward(x, params):
    """x: (B, S, D) float32. Weights are pre-transposed to (in, out) so y = x @ W
    (equivalent to PyTorch's y = x @ W.T with W stored (out, in))."""
    b, s, d = x.shape
    n = b * s
    x2d = x.reshape(n, d)                      # free row-major reshape in XLA

    full = lambda shape: pl.BlockSpec(shape, lambda: (0,) * len(shape))
    out2d = pl.pallas_call(
        feed_forward_kernel,
        out_shape=jax.ShapeDtypeStruct((n, d), x.dtype),
        in_specs=[
            full((n, d)),          # x  (whole folded activation in VMEM)
            full((d, HIDDEN)),     # w1
            full((d, HIDDEN)),     # w3
            full((HIDDEN, d)),     # w2
        ],
        out_specs=full((n, d)),
    )(x2d, params["w1"], params["w3"], params["w2"])

    return out2d.reshape(b, s, d)


def init_params(key):
    ks = jax.random.split(key, 3)
    scale = 0.05
    return {
        # Linear weights already transposed to (in_features, out_features)
        "w1": scale * jax.random.normal(ks[0], (D, HIDDEN), jnp.float32),
        "w2": scale * jax.random.normal(ks[1], (HIDDEN, D), jnp.float32),
        "w3": scale * jax.random.normal(ks[2], (D, HIDDEN), jnp.float32),
    }


def reference_feed_forward(x, p):
    """Pure-JAX reference matching the PyTorch forward (dropout=0 / eval)."""
    a = x @ p["w1"]
    g = x @ p["w3"]
    return (jax.nn.silu(a) * g) @ p["w2"]


if __name__ == "__main__":
    key = jax.random.PRNGKey(0)
    kx, kp = jax.random.split(key)
    x = jax.random.normal(kx, (B, S, D), jnp.float32)
    params = init_params(kp)

    out = feed_forward(x, params)
    out = jax.block_until_ready(out)

    ref = reference_feed_forward(x, params)
    assert out.shape == (B, S, D)
    assert jnp.allclose(out, ref, rtol=1e-4, atol=1e-4), "mismatch vs reference"

    print("KERNEL_OK")
</pallas_src>

<mosaic_0001>
module attributes {stable_mosaic.version = 11 : i64} {
  func.func @feed_forward_kernel(%arg0: memref<16x32xf32, #tpu.memory_space<vmem>>, %arg1: memref<32x96xf32, #tpu.memory_space<vmem>>, %arg2: memref<32x96xf32, #tpu.memory_space<vmem>>, %arg3: memref<96x32xf32, #tpu.memory_space<vmem>>, %arg4: memref<16x32xf32, #tpu.memory_space<vmem>>) attributes {dimension_semantics = [], scalar_prefetch = 0 : i64, scratch_operands = 0 : i64, tpu.core_type = #tpu.core_type<tc>} {
    %c0 = arith.constant 0 : index
    %c0_0 = arith.constant 0 : index
    %0 = vector.load %arg0[%c0, %c0_0] : memref<16x32xf32, #tpu.memory_space<vmem>>, vector<16x32xf32>
    %c0_1 = arith.constant 0 : index
    %c0_2 = arith.constant 0 : index
    %1 = vector.load %arg1[%c0_1, %c0_2] : memref<32x96xf32, #tpu.memory_space<vmem>>, vector<32x96xf32>
    %cst = arith.constant dense<0.000000e+00> : vector<16x96xf32>
    %2 = tpu.matmul %0, %1, %cst {dimension_numbers = #tpu.dot_dimension_numbers<[1], [0], [0], [1], [0, 0, 1, 1], [], []>} : vector<16x32xf32>, vector<32x96xf32>, vector<16x96xf32> -> vector<16x96xf32>
    %c0_3 = arith.constant 0 : index
    %c0_4 = arith.constant 0 : index
    %3 = vector.load %arg2[%c0_3, %c0_4] : memref<32x96xf32, #tpu.memory_space<vmem>>, vector<32x96xf32>
    %cst_5 = arith.constant dense<0.000000e+00> : vector<16x96xf32>
    %4 = tpu.matmul %0, %3, %cst_5 {dimension_numbers = #tpu.dot_dimension_numbers<[1], [0], [0], [1], [0, 0, 1, 1], [], []>} : vector<16x32xf32>, vector<32x96xf32>, vector<16x96xf32> -> vector<16x96xf32>
    %5 = arith.negf %2 : vector<16x96xf32>
    %6 = math.exp %5 : vector<16x96xf32>
    %cst_6 = arith.constant 1.000000e+00 : f32
    %7 = vector.broadcast %cst_6 : f32 to vector<16x96xf32>
    %8 = arith.addf %7, %6 : vector<16x96xf32>
    %9 = arith.divf %7, %8 : vector<16x96xf32>
    %10 = arith.mulf %2, %9 : vector<16x96xf32>
    %11 = arith.mulf %10, %4 : vector<16x96xf32>
    %c0_7 = arith.constant 0 : index
    %c0_8 = arith.constant 0 : index
    %12 = vector.load %arg3[%c0_7, %c0_8] : memref<96x32xf32, #tpu.memory_space<vmem>>, vector<96x32xf32>
    %cst_9 = arith.constant dense<0.000000e+00> : vector<16x32xf32>
    %13 = tpu.matmul %11, %12, %cst_9 {dimension_numbers = #tpu.dot_dimension_numbers<[1], [0], [0], [1], [0, 0, 1, 1], [], []>} : vector<16x96xf32>, vector<96x32xf32>, vector<16x32xf32> -> vector<16x32xf32>
    %c0_10 = arith.constant 0 : index
    %c0_11 = arith.constant 0 : index
    %14 = vector.load %arg4[%c0_10, %c0_11] : memref<16x32xf32, #tpu.memory_space<vmem>>, vector<16x32xf32>
    tpu.vector_store %arg4[%c0_10, %c0_11], %13 {strides = array<i32>} : memref<16x32xf32, #tpu.memory_space<vmem>>, vector<16x32xf32>,
    return
  }
}

</mosaic_0001>

<llo_original>
// kernel: tpu_custom_call.1
$region0: #{tpu_custom_call.1}
  #allocation0 [shape = 'u32[]', space=smem, size = 0x4, offset = 0x4, fixed_abs, tag = 'smem constant byte address 0x4 - core index']
  #allocation1 [shape = 'u32[144,128]{1,0:T(1,128)}', space=vmem, size = 0x12000, scoped, tag = 'internal scratch']
  %s0 = inlined_call_operand.vmem [shape: f32[16,32], index: 0, kind: input, shape index: {}]
  %s1 = inlined_call_operand.vmem [shape: f32[32,96], index: 1, kind: input, shape index: {}]
  %s2 = inlined_call_operand.vmem [shape: f32[32,96], index: 2, kind: input, shape index: {}]
  %s3 = inlined_call_operand.vmem [shape: f32[96,32], index: 3, kind: input, shape index: {}]
  %s4 = inlined_call_operand.hbm [shape: f32[16,32], index: 4, kind: output, shape index: {}]
  %s5 = sld [smem:[#allocation0]]
  $region26: #{tpu_custom_call.1} parent=0
    _
  %s7 = ssub.s32 1, %s5
  %s8 = scalar_select 0, %s7, %s5
  $region1: #{tpu_custom_call.1} parent=0
    #allocation2 [shape = 'u8[8192]{0}', space=vmem, size = 0x2000, scoped, tag = 'output window, operand 0, single buffered']
    #allocation3 [shape = 's32[1]{0}', space=sflag, size = 0x4, scoped, tag = 'scoped memory for tpu_custom_call.1']
    %9 = vsyncpa [#allocation3], 0
    // Predicated region
    $region2: #{tpu_custom_call.1} parent=1 // pred_check
      _
    $region3: #{tpu_custom_call.1} parent=1 // pred_check_branch
      %11 = sbr.rel (0) target = $region5
    $region4: #{tpu_custom_call.1} parent=1 // pred_region
      _
    $region5: #{tpu_custom_call.1} parent=1 // pred_fallthru
      _
    // Predicated region
    $region6: #{tpu_custom_call.1} parent=1 // pred_check
      _
    $region7: #{tpu_custom_call.1} parent=1 // pred_check_branch
      %13 = sbr.rel (0) target = $region9
    $region8: #{tpu_custom_call.1} parent=1 // pred_region
      _
    $region9: #{tpu_custom_call.1} parent=1 // pred_fallthru
      _
    // Predicated region
    $region10: #{tpu_custom_call.1} parent=1 // pred_check
      _
    $region11: #{tpu_custom_call.1} parent=1 // pred_check_branch
      %15 = sbr.rel (0) target = $region13
    $region12: #{tpu_custom_call.1} parent=1 // pred_region
      _
    $region13: #{tpu_custom_call.1} parent=1 // pred_fallthru
      _
    // Predicated region
    $region14: #{tpu_custom_call.1} parent=1 // pred_check
      _
    $region15: #{tpu_custom_call.1} parent=1 // pred_check_branch
      %17 = sbr.rel (0) target = $region17
    $region16: #{tpu_custom_call.1} parent=1 // pred_region
      _
    $region17: #{tpu_custom_call.1} parent=1 // pred_fallthru
      _
    %v18 = vld [vmem:[%s0] sm:$0xff]
    %v19 = vld [vmem:[%s0 + $0x8] sm:$0xff]
    %v20 = vld [vmem:[%s1] sm:$0xff]
    %v21 = vld [vmem:[%s1 + $0x8] sm:$0xff]
    %v22 = vld [vmem:[%s1 + $0x10] sm:$0xff]
    %v23 = vld [vmem:[%s1 + $0x18] sm:$0xff]
    %vm24 = vcmask 261120
    %v26 = vsel %vm24, %v18, 0
    %v29 = vsel %vm24, %v19, 0
    %31 = vmatprep.subr.mxu0 0.0
    %32 = vmatpush1.msra.mxu0 %v20
    %33 = vmatprep.subr.mxu0 0.0
    %34 = vmatpush1.msra.mxu0 %v21
    %35 = vmatprep.subr.mxu0 0.0
    %36 = vmatpush1.msra.mxu0 %v22
    %37 = vmatprep.subr.mxu0 0.0
    %38 = vmatpush1.msra.mxu0 %v23
    %39 = vmatprep.subr.mxu0 0.0
    %40 = vmatpush1.msra.mxu0 0.0
    %41 = vmatprep.subr.mxu0 0.0
    %42 = vmatpush1.msra.mxu0 0.0
    %43 = vmatprep.subr.mxu0 0.0
    %44 = vmatpush1.msra.mxu0 0.0
    %45 = vmatprep.subr.mxu0 0.0
    %46 = vmatpush1.msra.mxu0 0.0
    %47 = vmatprep.subr.mxu0 0.0
    %48 = vmatpush1.msra.mxu0 0.0
    %49 = vmatprep.subr.mxu0 0.0
    %50 = vmatpush1.msra.mxu0 0.0
    %51 = vmatprep.subr.mxu0 0.0
    %52 = vmatpush1.msra.mxu0 0.0
    %53 = vmatprep.subr.mxu0 0.0
    %54 = vmatpush1.msra.mxu0 0.0
    %55 = vmatprep.subr.mxu0 0.0
    %56 = vmatpush1.msra.mxu0 0.0
    %57 = vmatprep.subr.mxu0 0.0
    %58 = vmatpush1.msra.mxu0 0.0
    %59 = vmatprep.subr.mxu0 0.0
    %60 = vmatpush1.msra.mxu0 0.0
    %61 = vmatprep.subr.mxu0 0.0
    %62 = vmatpush1.msra.mxu0 0.0
    %63 = vmatprep.subr.mxu0 0.0
    %64 = vmatpush1.msra.mxu0 0.0
    %65 = vmatprep.subr.mxu0 0.0
    %66 = vmatpush1.msra.mxu0 0.0
    %67 = vmatprep.subr.mxu0 0.0
    %68 = vmatpush1.msra.mxu0 0.0
    %69 = vmatprep.subr.mxu0 0.0
    %70 = vmatpush1.msra.mxu0 0.0
    %71 = vmatprep.subr.mxu0 0.0
    %72 = vmatpush1.msra.mxu0 0.0
    %73 = vmatprep.subr.mxu0 0.0
    %74 = vmatpush1.msra.mxu0 0.0
    %75 = vmatprep.subr.mxu0 0.0
    %76 = vmatpush1.msra.mxu0 0.0
    %77 = vmatprep.subr.mxu0 0.0
    %78 = vmatpush1.msra.mxu0 0.0
    %79 = vmatprep.subr.mxu0 0.0
    %80 = vmatpush1.msra.mxu0 0.0
    %81 = vmatprep.subr.mxu0 0.0
    %82 = vmatpush1.msra.mxu0 0.0
    %83 = vmatprep.subr.mxu0 0.0
    %84 = vmatpush1.msra.mxu0 0.0
    %85 = vmatprep.subr.mxu0 0.0
    %86 = vmatpush1.msra.mxu0 0.0
    %87 = vmatprep.subr.mxu0 0.0
    %88 = vmatpush1.msra.mxu0 0.0
    %89 = vmatprep.subr.mxu0 0.0
    %90 = vmatpush1.msra.mxu0 0.0
    %91 = vmatprep.subr.mxu0 0.0
    %92 = vmatpush1.msra.mxu0 0.0
    %93 = vmatprep.subr.mxu0 0.0
    %94 = vmatpush1.msra.mxu0 0.0
    %95 = vmatprep.mubr.f32.mxu0 0.0
    %96 = vmatmul.mubr.f32.gmra.mrb[0].mxu0 %v26
    %v97 = vpop.f32.mrb[0].mxu0
    %v98 = vadd.f32 0.0, %v97
    %v99 = vpop.f32.mrb[0].mxu0
    %100 = vmatprep.mubr.f32.mxu0 0.0
    %101 = vmatmul.mubr.f32.gmra.mrb[0].mxu0 %v29
    %v102 = vpop.f32.mrb[0].mxu0
    %v103 = vadd.f32 0.0, %v102
    %v104 = vpop.f32.mrb[0].mxu0
    %105 = vdwg.mxu0
    %v106 = vld [vmem:[%s2] sm:$0xff]
    %v107 = vld [vmem:[%s2 + $0x8] sm:$0xff]
    %v108 = vld [vmem:[%s2 + $0x10] sm:$0xff]
    %v109 = vld [vmem:[%s2 + $0x18] sm:$0xff]
    %110 = vmatprep.subr.mxu0 0.0
    %111 = vmatpush1.msra.mxu0 %v106
    %112 = vmatprep.subr.mxu0 0.0
    %113 = vmatpush1.msra.mxu0 %v107
    %114 = vmatprep.subr.mxu0 0.0
    %115 = vmatpush1.msra.mxu0 %v108
    %116 = vmatprep.subr.mxu0 0.0
    %117 = vmatpush1.msra.mxu0 %v109
    %118 = vmatprep.subr.mxu0 0.0
    %119 = vmatpush1.msra.mxu0 0.0
    %120 = vmatprep.subr.mxu0 0.0
    %121 = vmatpush1.msra.mxu0 0.0
    %122 = vmatprep.subr.mxu0 0.0
    %123 = vmatpush1.msra.mxu0 0.0
    %124 = vmatprep.subr.mxu0 0.0
    %125 = vmatpush1.msra.mxu0 0.0
    %126 = vmatprep.subr.mxu0 0.0
    %127 = vmatpush1.msra.mxu0 0.0
    %128 = vmatprep.subr.mxu0 0.0
    %129 = vmatpush1.msra.mxu0 0.0
    %130 = vmatprep.subr.mxu0 0.0
    %131 = vmatpush1.msra.mxu0 0.0
    %132 = vmatprep.subr.mxu0 0.0
    %133 = vmatpush1.msra.mxu0 0.0
    %134 = vmatprep.subr.mxu0 0.0
    %135 = vmatpush1.msra.mxu0 0.0
    %136 = vmatprep.subr.mxu0 0.0
    %137 = vmatpush1.msra.mxu0 0.0
    %138 = vmatprep.subr.mxu0 0.0
    %139 = vmatpush1.msra.mxu0 0.0
    %140 = vmatprep.subr.mxu0 0.0
    %141 = vmatpush1.msra.mxu0 0.0
    %142 = vmatprep.subr.mxu0 0.0
    %143 = vmatpush1.msra.mxu0 0.0
    %144 = vmatprep.subr.mxu0 0.0
    %145 = vmatpush1.msra.mxu0 0.0
    %146 = vmatprep.subr.mxu0 0.0
    %147 = vmatpush1.msra.mxu0 0.0
    %148 = vmatprep.subr.mxu0 0.0
    %149 = vmatpush1.msra.mxu0 0.0
    %150 = vmatprep.subr.mxu0 0.0
    %151 = vmatpush1.msra.mxu0 0.0
    %152 = vmatprep.subr.mxu0 0.0
    %153 = vmatpush1.msra.mxu0 0.0
    %154 = vmatprep.subr.mxu0 0.0
    %155 = vmatpush1.msra.mxu0 0.0
    %156 = vmatprep.subr.mxu0 0.0
    %157 = vmatpush1.msra.mxu0 0.0
    %158 = vmatprep.subr.mxu0 0.0
    %159 = vmatpush1.msra.mxu0 0.0
    %160 = vmatprep.subr.mxu0 0.0
    %161 = vmatpush1.msra.mxu0 0.0
    %162 = vmatprep.subr.mxu0 0.0
    %163 = vmatpush1.msra.mxu0 0.0
    %164 = vmatprep.subr.mxu0 0.0
    %165 = vmatpush1.msra.mxu0 0.0
    %166 = vmatprep.subr.mxu0 0.0
    %167 = vmatpush1.msra.mxu0 0.0
    %168 = vmatprep.subr.mxu0 0.0
    %169 = vmatpush1.msra.mxu0 0.0
    %170 = vmatprep.subr.mxu0 0.0
    %171 = vmatpush1.msra.mxu0 0.0
    %172 = vmatprep.subr.mxu0 0.0
    %173 = vmatpush1.msra.mxu0 0.0
    %174 = vmatprep.mubr.f32.mxu0 0.0
    %175 = vmatmul.mubr.f32.gmra.mrb[0].mxu0 %v26
    %v176 = vpop.f32.mrb[0].mxu0
    %v177 = vadd.f32 0.0, %v176
    %v178 = vpop.f32.mrb[0].mxu0
    %179 = vmatprep.mubr.f32.mxu0 0.0
    %180 = vmatmul.mubr.f32.gmra.mrb[0].mxu0 %v29
    %v181 = vpop.f32.mrb[0].mxu0
    %v182 = vadd.f32 0.0, %v181
    %v183 = vpop.f32.mrb[0].mxu0
    %184 = vdwg.mxu0
    %v185 = vxor.u32 %v98, 2147483648
    %v186 = vxor.u32 %v103, 2147483648
    %v187 = vmul.f32 %v185, 1.442695
    %v188 = vpow.pop %v187
    %v189 = vmul.f32 %v186, 1.442695
    %v190 = vpow.pop %v189
    %v191 = vadd.f32 %v188, 1.0
    %v192 = vadd.f32 %v190, 1.0
    %v193 = vrcp.pop %v191
    %v194 = vmul.f32 1.0, %v193
    %v195 = vrcp.pop %v192
    %v196 = vmul.f32 1.0, %v195
    %v197 = vmul.f32 %v98, %v194
    %v198 = vmul.f32 %v103, %v196
    %v199 = vmul.f32 %v197, %v177
    %v200 = vmul.f32 %v198, %v182
    %v201 = vld [vmem:[%s3] sm:$0xff]
    %v202 = vld [vmem:[%s3 + $0x8] sm:$0xff]
    %v203 = vld [vmem:[%s3 + $0x10] sm:$0xff]
    %v204 = vld [vmem:[%s3 + $0x18] sm:$0xff]
    %v205 = vld [vmem:[%s3 + $0x20] sm:$0xff]
    %v206 = vld [vmem:[%s3 + $0x28] sm:$0xff]
    %v207 = vld [vmem:[%s3 + $0x30] sm:$0xff]
    %v208 = vld [vmem:[%s3 + $0x38] sm:$0xff]
    %v209 = vld [vmem:[%s3 + $0x40] sm:$0xff]
    %v210 = vld [vmem:[%s3 + $0x48] sm:$0xff]
    %v211 = vld [vmem:[%s3 + $0x50] sm:$0xff]
    %v212 = vld [vmem:[%s3 + $0x58] sm:$0xff]
    %vm213 = vcmask 785408
    %v215 = vsel %vm213, %v199, 0
    %v218 = vsel %vm213, %v200, 0
    %220 = vmatprep.subr.mxu0 0.0
    %221 = vmatpush1.msra.mxu0 %v201
    %222 = vmatprep.subr.mxu0 0.0
    %223 = vmatpush1.msra.mxu0 %v202
    %224 = vmatprep.subr.mxu0 0.0
    %225 = vmatpush1.msra.mxu0 %v203
    %226 = vmatprep.subr.mxu0 0.0
    %227 = vmatpush1.msra.mxu0 %v204
    %228 = vmatprep.subr.mxu0 0.0
    %229 = vmatpush1.msra.mxu0 %v205
    %230 = vmatprep.subr.mxu0 0.0
    %231 = vmatpush1.msra.mxu0 %v206
    %232 = vmatprep.subr.mxu0 0.0
    %233 = vmatpush1.msra.mxu0 %v207
    %234 = vmatprep.subr.mxu0 0.0
    %235 = vmatpush1.msra.mxu0 %v208
    %236 = vmatprep.subr.mxu0 0.0
    %237 = vmatpush1.msra.mxu0 %v209
    %238 = vmatprep.subr.mxu0 0.0
    %239 = vmatpush1.msra.mxu0 %v210
    %240 = vmatprep.subr.mxu0 0.0
    %241 = vmatpush1.msra.mxu0 %v211
    %242 = vmatprep.subr.mxu0 0.0
    %243 = vmatpush1.msra.mxu0 %v212
    %244 = vmatprep.subr.mxu0 0.0
    %245 = vmatpush1.msra.mxu0 0.0
    %246 = vmatprep.subr.mxu0 0.0
    %247 = vmatpush1.msra.mxu0 0.0
    %248 = vmatprep.subr.mxu0 0.0
    %249 = vmatpush1.msra.mxu0 0.0
    %250 = vmatprep.subr.mxu0 0.0
    %251 = vmatpush1.msra.mxu0 0.0
    %252 = vmatprep.subr.mxu0 0.0
    %253 = vmatpush1.msra.mxu0 0.0
    %254 = vmatprep.subr.mxu0 0.0
    %255 = vmatpush1.msra.mxu0 0.0
    %256 = vmatprep.subr.mxu0 0.0
    %257 = vmatpush1.msra.mxu0 0.0
    %258 = vmatprep.subr.mxu0 0.0
    %259 = vmatpush1.msra.mxu0 0.0
    %260 = vmatprep.subr.mxu0 0.0
    %261 = vmatpush1.msra.mxu0 0.0
    %262 = vmatprep.subr.mxu0 0.0
    %263 = vmatpush1.msra.mxu0 0.0
    %264 = vmatprep.subr.mxu0 0.0
    %265 = vmatpush1.msra.mxu0 0.0
    %266 = vmatprep.subr.mxu0 0.0
    %267 = vmatpush1.msra.mxu0 0.0
    %268 = vmatprep.subr.mxu0 0.0
    %269 = vmatpush1.msra.mxu0 0.0
    %270 = vmatprep.subr.mxu0 0.0
    %271 = vmatpush1.msra.mxu0 0.0
    %272 = vmatprep.subr.mxu0 0.0
    %273 = vmatpush1.msra.mxu0 0.0
    %274 = vmatprep.subr.mxu0 0.0
    %275 = vmatpush1.msra.mxu0 0.0
    %276 = vmatprep.subr.mxu0 0.0
    %277 = vmatpush1.msra.mxu0 0.0
    %278 = vmatprep.subr.mxu0 0.0
    %279 = vmatpush1.msra.mxu0 0.0
    %280 = vmatprep.subr.mxu0 0.0
    %281 = vmatpush1.msra.mxu0 0.0
    %282 = vmatprep.subr.mxu0 0.0
    %283 = vmatpush1.msra.mxu0 0.0
    %284 = vmatprep.mubr.f32.mxu0 0.0
    %285 = vmatmul.mubr.f32.gmra.mrb[0].mxu0 %v215
    %v286 = vpop.f32.mrb[0].mxu0
    %v287 = vadd.f32 0.0, %v286
    %v288 = vpop.f32.mrb[0].mxu0
    %289 = vmatprep.mubr.f32.mxu0 0.0
    %290 = vmatmul.mubr.f32.gmra.mrb[0].mxu0 %v218
    %v291 = vpop.f32.mrb[0].mxu0
    %v292 = vadd.f32 0.0, %v291
    %v293 = vpop.f32.mrb[0].mxu0
    %294 = vdwg.mxu0
    %295 = vst.msk [vmem:[#allocation2] sm:$0xff] %vm24, %v287
    %296 = vst.msk [vmem:[#allocation2 + $0x8] sm:$0xff] %vm24, %v292
    // Predicated region
    $region18: #{tpu_custom_call.1} parent=1 // pred_check
      _
    $region19: #{tpu_custom_call.1} parent=1 // pred_check_branch
      %298 = sbr.rel (0) target = $region21
    $region20: #{tpu_custom_call.1} parent=1 // pred_region
      %s300 = ssub.s32 256, 256
      %301 = vsyncadd [#allocation3], %s300
      %s302 = sshll.u32 [#allocation2], 4
      %s303 = int_to_ptr.vmem [resolvable:$true] %s302
      %308 = dma.vmem_to_hbm [thread:$0]  %s303, 256, %s4, [#allocation3], 128, 128, 8
    $region21: #{tpu_custom_call.1} parent=1 // pred_fallthru
      _
    // Predicated region
    $region22: #{tpu_custom_call.1} parent=1 // pred_check
      _
    $region23: #{tpu_custom_call.1} parent=1 // pred_check_branch
      %310 = sbr.rel (0) target = $region25
    $region24: #{tpu_custom_call.1} parent=1 // pred_region
      %311 = dma.done [#allocation3], 256
    $region25: #{tpu_custom_call.1} parent=1 // pred_fallthru
      _
    %312 = vsyncpa [#allocation3], 1

</llo_original>
